<compile_context>
chip_gen: v5e
topology: v5e:2x2
jax: 0.10.0
libtpu: 0.0.40
codegen_flags: <defaults>
</compile_context>

<pallas_src>
import functools
from typing import NamedTuple

import jax
import jax.numpy as jnp
from jax import lax
from jax.experimental import pallas as pl
from jax.experimental.pallas import tpu as pltpu

_LANE = 128
_SUBLANE = 8


def _round_up(x, m):
    return (x + m - 1) // m * m


def _cdiv(a, b):
    return -(-a // b)


# ---------------------------------------------------------------------------
# Kernel bodies
# ---------------------------------------------------------------------------

def _mlp_logits(x_ref, w1_ref, b1_ref, w2_ref, b2_ref, w3_ref, b3_ref):
    """Fused 3-matmul MLP: bf16 MXU inputs, f32 accumulation, f32 epilogue."""
    # obs.float() in the reference; cast to bf16 in-kernel (cheap VPU cast,
    # saves a wrapper-side HBM pass over the input).
    x = x_ref[...].astype(jnp.bfloat16)
    h1 = jnp.tanh(
        jnp.dot(x, w1_ref[...], preferred_element_type=jnp.float32)
        + b1_ref[...])
    h2 = jnp.tanh(
        jnp.dot(h1.astype(jnp.bfloat16), w2_ref[...],
                preferred_element_type=jnp.float32)
        + b2_ref[...])
    logits = (
        jnp.dot(h2.astype(jnp.bfloat16), w3_ref[...],
                preferred_element_type=jnp.float32)
        + b3_ref[...])
    return logits  # f32, (tb, O_pad)


def _row_argmax(logits_f32, num_valid_out):
    """First-occurrence argmax over the valid (un-padded) head columns."""
    col = lax.broadcasted_iota(jnp.int32, logits_f32.shape, 1)
    valid = col < num_valid_out
    masked = jnp.where(valid, logits_f32, -jnp.inf)
    row_max = jnp.max(masked, axis=-1, keepdims=True)
    is_max = jnp.logical_and(valid, masked == row_max)
    sentinel = jnp.int32(logits_f32.shape[-1])
    return jnp.min(jnp.where(is_max, col, sentinel), axis=-1, keepdims=True)


def _mlp_kernel_with_logits(num_valid_out, x_ref, w1_ref, b1_ref, w2_ref,
                            b2_ref, w3_ref, b3_ref, act_ref, logits_ref):
    logits = _mlp_logits(x_ref, w1_ref, b1_ref, w2_ref, b2_ref, w3_ref, b3_ref)
    logits_store = logits.astype(logits_ref.dtype)      # bf16, lane-dense
    logits_ref[...] = logits_store
    # Argmax on the *stored* (bf16-rounded) values so actions and returned
    # logits are always consistent.
    act_ref[...] = _row_argmax(logits_store.astype(jnp.float32), num_valid_out)


def _mlp_kernel_actions_only(num_valid_out, x_ref, w1_ref, b1_ref, w2_ref,
                             b2_ref, w3_ref, b3_ref, act_ref):
    logits = _mlp_logits(x_ref, w1_ref, b1_ref, w2_ref, b2_ref, w3_ref, b3_ref)
    # Round to bf16 first so actions are identical to the with-logits variant.
    logits_q = logits.astype(jnp.bfloat16).astype(jnp.float32)
    act_ref[...] = _row_argmax(logits_q, num_valid_out)


# ---------------------------------------------------------------------------
# Parameter preparation (run ONCE at load time, not per forward)
# ---------------------------------------------------------------------------

class PreparedParams(NamedTuple):
    w1: jax.Array   # (F, H_pad)      bf16
    b1: jax.Array   # (1, H_pad)      f32
    w2: jax.Array   # (H_pad, H_pad)  bf16
    b2: jax.Array   # (1, H_pad)      f32
    w3: jax.Array   # (H_pad, O_pad)  bf16
    b3: jax.Array   # (1, O_pad)      f32
    out_size: int


def prepare_params(params):
    """bf16 weights, f32 (1, n) biases; hidden and head dims zero-padded to
    lane width (tanh(0)=0 and zero weight rows/cols => numerically exact)."""
    w1, b1, w2, b2, w3, b3 = params
    in_size, hidden = w1.shape
    out_size = w3.shape[1]
    h_pad = _round_up(max(hidden, 1), _LANE)
    o_pad = _round_up(max(out_size, 1), _LANE)

    def pad2(a, shape):
        buf = jnp.zeros(shape, jnp.float32)
        return buf.at[:a.shape[0], :a.shape[1]].set(a.astype(jnp.float32))

    return PreparedParams(
        w1=pad2(w1, (in_size, h_pad)).astype(jnp.bfloat16),
        b1=pad2(b1.reshape(1, -1), (1, h_pad)),
        w2=pad2(w2, (h_pad, h_pad)).astype(jnp.bfloat16),
        b2=pad2(b2.reshape(1, -1), (1, h_pad)),
        w3=pad2(w3, (h_pad, o_pad)).astype(jnp.bfloat16),
        b3=pad2(b3.reshape(1, -1), (1, o_pad)),
        out_size=out_size,
    )


def _const_block_spec(shape, single_buffer):
    """Full-tensor block with a constant index_map (weights / biases).

    The block never changes across grid steps, so when supported we
    single-buffer it (a second pipeline buffer is pure VMEM waste)."""
    index_map = lambda *args: (0,) * len(shape)
    if single_buffer:
        return pl.BlockSpec(shape, index_map, pipeline_mode=pl.Buffered(1))
    return pl.BlockSpec(shape, index_map)


# ---------------------------------------------------------------------------
# Forward wrapper
# ---------------------------------------------------------------------------

def feedforward_forward(obs, params, deterministic=True, *, batch_tile=None,
                        return_logits=False):
    """Equivalent of FeedForward.forward(obs, deterministic=True).

    `params` may be the raw 6-tuple (w1,b1,w2,b2,w3,b3) or a PreparedParams
    (preferred: prepare once at load time). Returns actions_idx, or
    (actions_idx, logits) when return_logits=True (logits exposed for tests).
    """
    # TODO(synk): the stochastic branch (`action_dist.sample()`) in the
    # reference calls .sample() on a Python list (an upstream bug); only the
    # deterministic argmax path is implemented.
    del deterministic

    if not isinstance(params, PreparedParams):
        params = prepare_params(params)

    B, F = obs.shape
    h_pad = params.w1.shape[1]
    o_pad = params.w3.shape[1]
    out_size = params.out_size

    # Batch tiling: fill the MXU M dimension with a big tile, minimise
    # padding, and keep >= 2 grid steps for large batches so the "parallel"
    # axis can shard across v7x's two TensorCores.
    if batch_tile is None:
        if B <= 512:
            tb = _round_up(B, _SUBLANE)
        else:
            n_steps = max(2, _cdiv(B, 1024))
            tb = _round_up(_cdiv(B, n_steps), _SUBLANE)
    else:
        tb = batch_tile
    B_pad = _round_up(B, tb)

    x = obs
    if B_pad != B:
        x = jnp.pad(x, ((0, B_pad - B), (0, 0)))

    grid = (B_pad // tb,)

    def run(single_buffer):
        const = lambda shape: _const_block_spec(shape, single_buffer)
        in_specs = [
            pl.BlockSpec((tb, F), lambda i: (i, 0)),    # obs tile (f32)
            const((F, h_pad)), const((1, h_pad)),       # W1, b1
            const((h_pad, h_pad)), const((1, h_pad)),   # W2, b2
            const((h_pad, o_pad)), const((1, o_pad)),   # W3, b3 (head)
        ]
        act_shape = jax.ShapeDtypeStruct((B_pad, 1), jnp.int32)
        act_spec = pl.BlockSpec((tb, 1), lambda i: (i, 0))
        if return_logits:
            kernel = functools.partial(_mlp_kernel_with_logits, out_size)
            out_shape = (act_shape,
                         jax.ShapeDtypeStruct((B_pad, o_pad), jnp.bfloat16))
            out_specs = (act_spec,
                         pl.BlockSpec((tb, o_pad), lambda i: (i, 0)))
        else:
            kernel = functools.partial(_mlp_kernel_actions_only, out_size)
            out_shape = act_shape
            out_specs = act_spec
        return pl.pallas_call(
            kernel,
            out_shape=out_shape,
            grid_spec=pltpu.PrefetchScalarGridSpec(
                num_scalar_prefetch=0,
                grid=grid,
                in_specs=in_specs,
                out_specs=out_specs,
            ),
            compiler_params=pltpu.CompilerParams(
                dimension_semantics=("parallel",),
            ),
        )(x, params.w1, params.b1, params.w2, params.b2, params.w3, params.b3)

    try:
        result = run(single_buffer=True)
    except (TypeError, NotImplementedError, ValueError,
            pltpu.LoweringException):
        # pipeline_mode / pl.Buffered(1) not supported by this Pallas build;
        # fall back to default double-buffered constant blocks.
        result = run(single_buffer=False)

    if return_logits:
        act, logits_pad = result
        logits = logits_pad[:B, :out_size].astype(jnp.float32)
        return act[:B, 0], logits
    return result[:B, 0]


# ---------------------------------------------------------------------------
# Deterministic synthetic init (matches nn.Linear fan-in uniform init).
# Weights are stored [in, out] so the kernel computes y = x @ W + b.
# ---------------------------------------------------------------------------

def init_params(key, input_size, hidden_size, output_size):
    k1, k2, k3 = jax.random.split(key, 3)

    def linear(k, fan_in, fan_out):
        bound = 1.0 / jnp.sqrt(fan_in)
        kw, kb = jax.random.split(k)
        w = jax.random.uniform(kw, (fan_in, fan_out), jnp.float32, -bound, bound)
        b = jax.random.uniform(kb, (fan_out,), jnp.float32, -bound, bound)
        return w, b

    w1, b1 = linear(k1, input_size, hidden_size)
    w2, b2 = linear(k2, hidden_size, hidden_size)
    w3, b3 = linear(k3, hidden_size, output_size)
    return (w1, b1, w2, b2, w3, b3)


if __name__ == "__main__":
    key = jax.random.PRNGKey(0)
    k_obs, k_par = jax.random.split(key)

    B, INPUT, HIDDEN, OUTPUT = 8, 32, 64, 16
    obs = jax.random.normal(k_obs, (B, INPUT), jnp.float32)
    raw_params = init_params(k_par, INPUT, HIDDEN, OUTPUT)

    # Prepare (cast + pad) the weights ONCE, as at model-load time.
    params = prepare_params(raw_params)

    actions, logits = feedforward_forward(obs, params, deterministic=True,
                                          return_logits=True)
    jax.block_until_ready(actions)
    jax.block_until_ready(logits)
    assert actions.shape == (B,)
    assert logits.shape == (B, OUTPUT)

    # In-kernel argmax must agree exactly with argmax over the kernel logits
    # (both are computed on the same bf16-rounded values).
    assert jnp.array_equal(actions, jnp.argmax(logits, axis=-1))

    # The actions-only (no logits writeback) path returns identical actions.
    actions_only = feedforward_forward(obs, params, deterministic=True,
                                       return_logits=False)
    jax.block_until_ready(actions_only)
    assert actions_only.shape == (B,)
    assert jnp.array_equal(actions, actions_only)

    w1, b1, w2, b2, w3, b3 = raw_params

    # Reference with the same bf16-matmul / f32-accumulate recipe.
    xb = obs.astype(jnp.bfloat16)
    h = jnp.tanh(jnp.dot(xb, w1.astype(jnp.bfloat16),
                         preferred_element_type=jnp.float32) + b1)
    h = jnp.tanh(jnp.dot(h.astype(jnp.bfloat16), w2.astype(jnp.bfloat16),
                         preferred_element_type=jnp.float32) + b2)
    ref_bf16 = jnp.dot(h.astype(jnp.bfloat16), w3.astype(jnp.bfloat16),
                       preferred_element_type=jnp.float32) + b3
    assert jnp.allclose(logits, ref_bf16, atol=2e-2, rtol=2e-2)

    # And stay close to the full-f32 reference (PyTorch semantics).
    hf = jnp.tanh(obs @ w1 + b1)
    hf = jnp.tanh(hf @ w2 + b2)
    ref_f32 = hf @ w3 + b3
    assert jnp.allclose(logits, ref_f32, atol=5e-2, rtol=5e-2)

    # Actions match the f32 reference argmax (tolerating numerical near-ties
    # introduced by the bf16 matmul inputs / bf16 logits rounding).
    ref_idx = jnp.argmax(ref_f32, axis=-1)
    picked = jnp.take_along_axis(ref_f32, actions[:, None], axis=-1)[:, 0]
    gap = jnp.abs(picked - ref_f32.max(axis=-1))
    assert bool(jnp.all((actions == ref_idx) | (gap < 2e-2)))

    print("KERNEL_OK")
</pallas_src>

<mosaic_0001>
module attributes {stable_mosaic.version = 11 : i64} {
  func.func @_mlp_kernel_with_logits(%arg0: i32, %arg1: memref<8x32xf32, #tpu.memory_space<vmem>>, %arg2: memref<32x128xbf16, #tpu.memory_space<vmem>>, %arg3: memref<1x128xf32, #tpu.memory_space<vmem>>, %arg4: memref<128x128xbf16, #tpu.memory_space<vmem>>, %arg5: memref<1x128xf32, #tpu.memory_space<vmem>>, %arg6: memref<128x128xbf16, #tpu.memory_space<vmem>>, %arg7: memref<1x128xf32, #tpu.memory_space<vmem>>, %arg8: memref<8x1xi32, #tpu.memory_space<vmem>>, %arg9: memref<8x128xbf16, #tpu.memory_space<vmem>>) attributes {dimension_semantics = [#tpu.dimension_semantics<parallel>], iteration_bounds = array<i64: 1>, scalar_prefetch = 0 : i64, scratch_operands = 0 : i64, tpu.core_type = #tpu.core_type<tc>, window_params = [{transform_indices = @transform_0, window_bounds = array<i64: 8, 32>}, {pipeline_mode = #tpu.pipeline_mode<synchronous>, transform_indices = @transform_1, window_bounds = array<i64: 32, 128>}, {pipeline_mode = #tpu.pipeline_mode<synchronous>, transform_indices = @transform_2, window_bounds = array<i64: 1, 128>}, {pipeline_mode = #tpu.pipeline_mode<synchronous>, transform_indices = @transform_3, window_bounds = array<i64: 128, 128>}, {pipeline_mode = #tpu.pipeline_mode<synchronous>, transform_indices = @transform_4, window_bounds = array<i64: 1, 128>}, {pipeline_mode = #tpu.pipeline_mode<synchronous>, transform_indices = @transform_5, window_bounds = array<i64: 128, 128>}, {pipeline_mode = #tpu.pipeline_mode<synchronous>, transform_indices = @transform_6, window_bounds = array<i64: 1, 128>}, {transform_indices = @transform_7, window_bounds = array<i64: 8, 1>}, {transform_indices = @transform_8, window_bounds = array<i64: 8, 128>}]} {
    %c0 = arith.constant 0 : index
    %c0_0 = arith.constant 0 : index
    %0 = vector.load %arg1[%c0, %c0_0] : memref<8x32xf32, #tpu.memory_space<vmem>>, vector<8x32xf32>
    %1 = arith.truncf %0 : vector<8x32xf32> to vector<8x32xbf16>
    %c0_1 = arith.constant 0 : index
    %c0_2 = arith.constant 0 : index
    %2 = vector.load %arg2[%c0_1, %c0_2] : memref<32x128xbf16, #tpu.memory_space<vmem>>, vector<32x128xbf16>
    %cst = arith.constant dense<0.000000e+00> : vector<8x128xf32>
    %3 = tpu.matmul %1, %2, %cst {dimension_numbers = #tpu.dot_dimension_numbers<[1], [0], [0], [1], [0, 0, 1, 1], [], []>} : vector<8x32xbf16>, vector<32x128xbf16>, vector<8x128xf32> -> vector<8x128xf32>
    %c0_3 = arith.constant 0 : index
    %c0_4 = arith.constant 0 : index
    %4 = vector.load %arg3[%c0_3, %c0_4] : memref<1x128xf32, #tpu.memory_space<vmem>>, vector<1x128xf32>
    %5 = vector.broadcast %4 : vector<1x128xf32> to vector<8x128xf32>
    %6 = arith.addf %3, %5 : vector<8x128xf32>
    %7 = math.tanh %6 : vector<8x128xf32>
    %8 = arith.truncf %7 : vector<8x128xf32> to vector<8x128xbf16>
    %c0_5 = arith.constant 0 : index
    %c0_6 = arith.constant 0 : index
    %9 = vector.load %arg4[%c0_5, %c0_6] : memref<128x128xbf16, #tpu.memory_space<vmem>>, vector<128x128xbf16>
    %cst_7 = arith.constant dense<0.000000e+00> : vector<8x128xf32>
    %10 = tpu.matmul %8, %9, %cst_7 {dimension_numbers = #tpu.dot_dimension_numbers<[1], [0], [0], [1], [0, 0, 1, 1], [], []>} : vector<8x128xbf16>, vector<128x128xbf16>, vector<8x128xf32> -> vector<8x128xf32>
    %c0_8 = arith.constant 0 : index
    %c0_9 = arith.constant 0 : index
    %11 = vector.load %arg5[%c0_8, %c0_9] : memref<1x128xf32, #tpu.memory_space<vmem>>, vector<1x128xf32>
    %12 = vector.broadcast %11 : vector<1x128xf32> to vector<8x128xf32>
    %13 = arith.addf %10, %12 : vector<8x128xf32>
    %14 = math.tanh %13 : vector<8x128xf32>
    %15 = arith.truncf %14 : vector<8x128xf32> to vector<8x128xbf16>
    %c0_10 = arith.constant 0 : index
    %c0_11 = arith.constant 0 : index
    %16 = vector.load %arg6[%c0_10, %c0_11] : memref<128x128xbf16, #tpu.memory_space<vmem>>, vector<128x128xbf16>
    %cst_12 = arith.constant dense<0.000000e+00> : vector<8x128xf32>
    %17 = tpu.matmul %15, %16, %cst_12 {dimension_numbers = #tpu.dot_dimension_numbers<[1], [0], [0], [1], [0, 0, 1, 1], [], []>} : vector<8x128xbf16>, vector<128x128xbf16>, vector<8x128xf32> -> vector<8x128xf32>
    %c0_13 = arith.constant 0 : index
    %c0_14 = arith.constant 0 : index
    %18 = vector.load %arg7[%c0_13, %c0_14] : memref<1x128xf32, #tpu.memory_space<vmem>>, vector<1x128xf32>
    %19 = vector.broadcast %18 : vector<1x128xf32> to vector<8x128xf32>
    %20 = arith.addf %17, %19 : vector<8x128xf32>
    %21 = arith.truncf %20 : vector<8x128xf32> to vector<8x128xbf16>
    %c0_15 = arith.constant 0 : index
    %c0_16 = arith.constant 0 : index
    %22 = vector.load %arg9[%c0_15, %c0_16] : memref<8x128xbf16, #tpu.memory_space<vmem>>, vector<8x128xbf16>
    tpu.vector_store %arg9[%c0_15, %c0_16], %21 {strides = array<i32>} : memref<8x128xbf16, #tpu.memory_space<vmem>>, vector<8x128xbf16>,
    %23 = arith.extf %21 : vector<8x128xbf16> to vector<8x128xf32>
    %24 = tpu.iota {dimensions = array<i32: 1>} : vector<8x128xi32>
    %c16_i32 = arith.constant 16 : i32
    %25 = vector.broadcast %c16_i32 : i32 to vector<8x128xi32>
    %26 = arith.cmpi slt, %24, %25 : vector<8x128xi32>
    %cst_17 = arith.constant 0xFF800000 : f32
    %27 = vector.broadcast %cst_17 : f32 to vector<8x128xf32>
    %28 = arith.select %26, %23, %27 : vector<8x128xi1>, vector<8x128xf32>
    %cst_18 = arith.constant dense<0xFF800000> : vector<8xf32>
    %29 = vector.multi_reduction <maximumf>, %28, %cst_18 [1] : vector<8x128xf32> to vector<8xf32>
    %30 = vector.shape_cast %29 : vector<8xf32> to vector<8x1xf32>
    %31 = vector.broadcast %30 : vector<8x1xf32> to vector<8x128xf32>
    %32 = arith.cmpf oeq, %28, %31 : vector<8x128xf32>
    %33 = arith.andi %26, %32 : vector<8x128xi1>
    %c128_i32 = arith.constant 128 : i32
    %34 = vector.broadcast %c128_i32 : i32 to vector<8x128xi32>
    %35 = arith.select %33, %24, %34 : vector<8x128xi1>, vector<8x128xi32>
    %cst_19 = arith.constant dense<2147483647> : vector<8xi32>
    %36 = vector.multi_reduction <minsi>, %35, %cst_19 [1] : vector<8x128xi32> to vector<8xi32>
    %37 = vector.shape_cast %36 : vector<8xi32> to vector<8x1xi32>
    %c0_20 = arith.constant 0 : index
    %c0_21 = arith.constant 0 : index
    %38 = vector.load %arg8[%c0_20, %c0_21] : memref<8x1xi32, #tpu.memory_space<vmem>>, vector<8x1xi32>
    tpu.vector_store %arg8[%c0_20, %c0_21], %37 {strides = array<i32>} : memref<8x1xi32, #tpu.memory_space<vmem>>, vector<8x1xi32>,
    return
  }
  func.func @transform_0(%arg0: i32) -> (i32, i32) {
    %c0_i32 = arith.constant 0 : i32
    %c0_i32_0 = arith.constant 0 : i32
    return %arg0, %c0_i32 : i32, i32
  }
  func.func @transform_1(%arg0: i32) -> (i32, i32) {
    %c0_i32 = arith.constant 0 : i32
    %c0_i32_0 = arith.constant 0 : i32
    %c0_i32_1 = arith.constant 0 : i32
    return %c0_i32, %c0_i32_0 : i32, i32
  }
  func.func @transform_2(%arg0: i32) -> (i32, i32) {
    %c0_i32 = arith.constant 0 : i32
    %c0_i32_0 = arith.constant 0 : i32
    %c0_i32_1 = arith.constant 0 : i32
    return %c0_i32, %c0_i32_0 : i32, i32
  }
  func.func @transform_3(%arg0: i32) -> (i32, i32) {
    %c0_i32 = arith.constant 0 : i32
    %c0_i32_0 = arith.constant 0 : i32
    %c0_i32_1 = arith.constant 0 : i32
    return %c0_i32, %c0_i32_0 : i32, i32
  }
  func.func @transform_4(%arg0: i32) -> (i32, i32) {
    %c0_i32 = arith.constant 0 : i32
    %c0_i32_0 = arith.constant 0 : i32
    %c0_i32_1 = arith.constant 0 : i32
    return %c0_i32, %c0_i32_0 : i32, i32
  }
  func.func @transform_5(%arg0: i32) -> (i32, i32) {
    %c0_i32 = arith.constant 0 : i32
    %c0_i32_0 = arith.constant 0 : i32
    %c0_i32_1 = arith.constant 0 : i32
    return %c0_i32, %c0_i32_0 : i32, i32
  }
  func.func @transform_6(%arg0: i32) -> (i32, i32) {
    %c0_i32 = arith.constant 0 : i32
    %c0_i32_0 = arith.constant 0 : i32
    %c0_i32_1 = arith.constant 0 : i32
    return %c0_i32, %c0_i32_0 : i32, i32
  }
  func.func @transform_7(%arg0: i32) -> (i32, i32) {
    %c0_i32 = arith.constant 0 : i32
    %c0_i32_0 = arith.constant 0 : i32
    return %arg0, %c0_i32 : i32, i32
  }
  func.func @transform_8(%arg0: i32) -> (i32, i32) {
    %c0_i32 = arith.constant 0 : i32
    %c0_i32_0 = arith.constant 0 : i32
    return %arg0, %c0_i32 : i32, i32
  }
}

</mosaic_0001>

<llo_original>
// kernel: tpu_custom_call.1
$region0: #{tpu_custom_call.1}
  #allocation0 [shape = 'u32[]', space=smem, size = 0x4, offset = 0x4, fixed_abs, tag = 'smem constant byte address 0x4 - core index']
  #allocation1 [shape = 'u32[72,128]{1,0:T(1,128)}', space=vmem, size = 0x9000, scoped, tag = 'internal scratch']
  %s0 = inlined_call_operand.hbm [shape: f32[8,32], index: 0, kind: input, shape index: {}]
  %s1 = inlined_call_operand.hbm [shape: bf16[32,128], index: 1, kind: input, shape index: {}]
  %s2 = inlined_call_operand.vmem [shape: f32[1,128], index: 2, kind: input, shape index: {}]
  %s3 = inlined_call_operand.hbm [shape: bf16[128,128], index: 3, kind: input, shape index: {}]
  %s4 = inlined_call_operand.vmem [shape: f32[1,128], index: 4, kind: input, shape index: {}]
  %s5 = inlined_call_operand.hbm [shape: bf16[128,128], index: 5, kind: input, shape index: {}]
  %s6 = inlined_call_operand.vmem [shape: f32[1,128], index: 6, kind: input, shape index: {}]
  %s7 = inlined_call_operand.vmem [shape: s32[8,1], index: 7, kind: output, shape index: {0}]
  %s8 = inlined_call_operand.hbm [shape: bf16[8,128], index: 8, kind: output, shape index: {1}]
  %9 = xla_tuple %s7, %s8
  %s10 = sld [smem:[#allocation0]]
  $region62: #{tpu_custom_call.1} parent=0
    _
  %s12 = ssub.s32 1, %s10
  %s13 = scalar_select 0, %s12, %s10
  $region1: #{tpu_custom_call.1} parent=0
    #allocation2 [shape = 'u8[4096]{0}', space=vmem, size = 0x1000, scoped, tag = 'input window, operand 0, single buffered']
    #allocation3 [shape = 's32[1]{0}', space=sflag, size = 0x4, scoped, tag = 'scoped memory for tpu_custom_call.1']
    #allocation4 [shape = 's32[1]{0}', space=sflag, size = 0x4, scoped, tag = 'scoped memory for tpu_custom_call.1']
    #allocation5 [shape = 'u8[8192]{0}', space=vmem, size = 0x2000, scoped, tag = 'input window, operand 1, single buffered']
    #allocation6 [shape = 's32[1]{0}', space=sflag, size = 0x4, scoped, tag = 'scoped memory for tpu_custom_call.1']
    #allocation7 [shape = 'u8[32768]{0}', space=vmem, size = 0x8000, scoped, tag = 'input window, operand 3, single buffered']
    #allocation8 [shape = 'u8[32768]{0}', space=vmem, size = 0x8000, scoped, tag = 'input window, operand 5, single buffered']
    #allocation9 [shape = 's32[1]{0}', space=sflag, size = 0x4, scoped, tag = 'scoped memory for tpu_custom_call.1']
    #allocation10 [shape = 'u8[2048]{0}', space=vmem, size = 0x800, scoped, tag = 'output window, operand 1, single buffered']
    %14 = vsyncpa [#allocation3], 0
    %15 = vsyncpa [#allocation6], 0
    %16 = vsyncpa [#allocation9], 0
    %17 = vsyncpa [#allocation4], 0
    // Predicated region
    $region2: #{tpu_custom_call.1} parent=1 // pred_check
      _
    $region3: #{tpu_custom_call.1} parent=1 // pred_check_branch
      %19 = sbr.rel (0) target = $region5
    $region4: #{tpu_custom_call.1} parent=1 // pred_region
      %21 = vsyncadd [#allocation3], 0
      %s23 = sshll.u32 %s0, 4
      %s24 = int_to_ptr.hbm [resolvable:$true] %s23
      %s25 = sshll.u32 [#allocation2], 4
      %s26 = int_to_ptr.vmem [resolvable:$true] %s25
      %28 = dma.hbm_to_vmem [thread:$0]  %s24, 128, %s26, [#allocation3]
    $region5: #{tpu_custom_call.1} parent=1 // pred_fallthru
      _
    // Predicated region
    $region6: #{tpu_custom_call.1} parent=1 // pred_check
      _
    $region7: #{tpu_custom_call.1} parent=1 // pred_check_branch
      %30 = sbr.rel (0) target = $region9
    $region8: #{tpu_custom_call.1} parent=1 // pred_region
      %32 = vsyncadd [#allocation6], 0
      %s33 = sshll.u32 %s1, 4
      %s34 = int_to_ptr.hbm [resolvable:$true] %s33
      %s35 = sshll.u32 [#allocation5], 4
      %s36 = int_to_ptr.vmem [resolvable:$true] %s35
      %41 = dma.hbm_to_vmem [thread:$0]  %s34, 256, %s36, [#allocation6], 64, 64, 4
    $region9: #{tpu_custom_call.1} parent=1 // pred_fallthru
      _
    // Predicated region
    $region10: #{tpu_custom_call.1} parent=1 // pred_check
      _
    $region11: #{tpu_custom_call.1} parent=1 // pred_check_branch
      %43 = sbr.rel (0) target = $region13
    $region12: #{tpu_custom_call.1} parent=1 // pred_region
      _
    $region13: #{tpu_custom_call.1} parent=1 // pred_fallthru
      _
    // Predicated region
    $region14: #{tpu_custom_call.1} parent=1 // pred_check
      _
    $region15: #{tpu_custom_call.1} parent=1 // pred_check_branch
      %45 = sbr.rel (0) target = $region17
    $region16: #{tpu_custom_call.1} parent=1 // pred_region
      %47 = vsyncadd [#allocation6], 0
      %s48 = sshll.u32 %s3, 4
      %s49 = int_to_ptr.hbm [resolvable:$true] %s48
      %s50 = sshll.u32 [#allocation7], 4
      %s51 = int_to_ptr.vmem [resolvable:$true] %s50
      %56 = dma.hbm_to_vmem [thread:$0]  %s49, 1024, %s51, [#allocation6], 64, 64, 4
    $region17: #{tpu_custom_call.1} parent=1 // pred_fallthru
      _
    // Predicated region
    $region18: #{tpu_custom_call.1} parent=1 // pred_check
      _
    $region19: #{tpu_custom_call.1} parent=1 // pred_check_branch
      %58 = sbr.rel (0) target = $region21
    $region20: #{tpu_custom_call.1} parent=1 // pred_region
      _
    $region21: #{tpu_custom_call.1} parent=1 // pred_fallthru
      _
    // Predicated region
    $region22: #{tpu_custom_call.1} parent=1 // pred_check
      _
    $region23: #{tpu_custom_call.1} parent=1 // pred_check_branch
      %60 = sbr.rel (0) target = $region25
    $region24: #{tpu_custom_call.1} parent=1 // pred_region
      %62 = vsyncadd [#allocation9], 0
      %s63 = sshll.u32 %s5, 4
      %s64 = int_to_ptr.hbm [resolvable:$true] %s63
      %s65 = sshll.u32 [#allocation8], 4
      %s66 = int_to_ptr.vmem [resolvable:$true] %s65
      %71 = dma.hbm_to_vmem [thread:$0]  %s64, 1024, %s66, [#allocation9], 64, 64, 4
    $region25: #{tpu_custom_call.1} parent=1 // pred_fallthru
      _
    // Predicated region
    $region26: #{tpu_custom_call.1} parent=1 // pred_check
      _
    $region27: #{tpu_custom_call.1} parent=1 // pred_check_branch
      %73 = sbr.rel (0) target = $region29
    $region28: #{tpu_custom_call.1} parent=1 // pred_region
      _
    $region29: #{tpu_custom_call.1} parent=1 // pred_fallthru
      _
    // Predicated region
    $region30: #{tpu_custom_call.1} parent=1 // pred_check
      _
    $region31: #{tpu_custom_call.1} parent=1 // pred_check_branch
      %75 = sbr.rel (0) target = $region33
    $region32: #{tpu_custom_call.1} parent=1 // pred_region
      %77 = dma.done [#allocation3], 128
    $region33: #{tpu_custom_call.1} parent=1 // pred_fallthru
      _
    // Predicated region
    $region34: #{tpu_custom_call.1} parent=1 // pred_check
      _
    $region35: #{tpu_custom_call.1} parent=1 // pred_check_branch
      %79 = sbr.rel (0) target = $region37
    $region36: #{tpu_custom_call.1} parent=1 // pred_region
      %81 = dma.done [#allocation6], 256
    $region37: #{tpu_custom_call.1} parent=1 // pred_fallthru
      _
    // Predicated region
    $region38: #{tpu_custom_call.1} parent=1 // pred_check
      _
    $region39: #{tpu_custom_call.1} parent=1 // pred_check_branch
      %83 = sbr.rel (0) target = $region41
    $region40: #{tpu_custom_call.1} parent=1 // pred_region
      %85 = dma.done [#allocation6], 1024
    $region41: #{tpu_custom_call.1} parent=1 // pred_fallthru
      _
    // Predicated region
    $region42: #{tpu_custom_call.1} parent=1 // pred_check
      _
    $region43: #{tpu_custom_call.1} parent=1 // pred_check_branch
      %87 = sbr.rel (0) target = $region45
    $region44: #{tpu_custom_call.1} parent=1 // pred_region
      %89 = dma.done [#allocation9], 1024
    $region45: #{tpu_custom_call.1} parent=1 // pred_fallthru
      _
    %v91 = vld [vmem:[#allocation2] sm:$0xff]
    %v92 = vpack.c.bf16 %v91, %v91
    %v93 = vld [vmem:[#allocation5] sm:$0xf]
    %v94 = vld [vmem:[#allocation5 + $0x4] sm:$0xf]
    %v95 = vld [vmem:[#allocation5 + $0x8] sm:$0xf]
    %v96 = vld [vmem:[#allocation5 + $0xc] sm:$0xf]
    %v97 = vld [vmem:[%s2] sm:$0x1]
    %v99 = vperm.slane %v97, 0
    %v105 = vunpack.c.l.b16 %v93
    %v106 = vunpack.c.l.b16 %v94
    %v107 = vunpack.c.l.b16 %v95
    %v108 = vunpack.c.l.b16 %v96
    %v109 = vpack.c.b16 %v106, %v105
    %v110 = vpack.c.b16 %v108, %v107
    %vm113 = vcmask 261120
    %v115 = vsel %vm113, %v92, 0
    %117 = vmatpush.bf16.msra.mxu0 0
    %118 = vmatpush.bf16.msra.mxu0 0
    %119 = vmatpush.bf16.msra.mxu0 0
    %120 = vmatpush.bf16.msra.mxu0 0
    %121 = vmatpush.bf16.msra.mxu0 0
    %122 = vmatpush.bf16.msra.mxu0 0
    %123 = vmatpush.bf16.msra.mxu0 %v110
    %124 = vmatpush.bf16.msra.mxu0 %v109
    %125 = vmatmul.bf16.gmra.mxu0 %v115
    %v126 = vpop.f32.mrf.mxu0
    %v127 = vadd.f32 %v99, %v126
    %v128 = vpop.f32.mrf.mxu0
    %129 = vdwg.mxu0
    %v130 = vtanh.pop %v127
    %v131 = vpack.c.bf16 %v130, %v130
    %v132 = vld [vmem:[#allocation7] sm:$0xf]
    %v133 = vld [vmem:[#allocation7 + $0x4] sm:$0xf]
    %v134 = vld [vmem:[#allocation7 + $0x8] sm:$0xf]
    %v135 = vld [vmem:[#allocation7 + $0xc] sm:$0xf]
    %v136 = vld [vmem:[#allocation7 + $0x10] sm:$0xf]
    %v137 = vld [vmem:[#allocation7 + $0x14] sm:$0xf]
    %v138 = vld [vmem:[#allocation7 + $0x18] sm:$0xf]
    %v139 = vld [vmem:[#allocation7 + $0x1c] sm:$0xf]
    %v140 = vld [vmem:[#allocation7 + $0x20] sm:$0xf]
    %v141 = vld [vmem:[#allocation7 + $0x24] sm:$0xf]
    %v142 = vld [vmem:[#allocation7 + $0x28] sm:$0xf]
    %v143 = vld [vmem:[#allocation7 + $0x2c] sm:$0xf]
    %v144 = vld [vmem:[#allocation7 + $0x30] sm:$0xf]
    %v145 = vld [vmem:[#allocation7 + $0x34] sm:$0xf]
    %v146 = vld [vmem:[#allocation7 + $0x38] sm:$0xf]
    %v147 = vld [vmem:[#allocation7 + $0x3c] sm:$0xf]
    %v148 = vld [vmem:[%s4] sm:$0x1]
    %v150 = vperm.slane %v148, 0
    %v168 = vunpack.c.l.b16 %v132
    %v169 = vunpack.c.l.b16 %v133
    %v170 = vunpack.c.l.b16 %v134
    %v171 = vunpack.c.l.b16 %v135
    %v172 = vunpack.c.l.b16 %v136
    %v173 = vunpack.c.l.b16 %v137
    %v174 = vunpack.c.l.b16 %v138
    %v175 = vunpack.c.l.b16 %v139
    %v176 = vunpack.c.l.b16 %v140
    %v177 = vunpack.c.l.b16 %v141
    %v178 = vunpack.c.l.b16 %v142
    %v179 = vunpack.c.l.b16 %v143
    %v180 = vunpack.c.l.b16 %v144
    %v181 = vunpack.c.l.b16 %v145
    %v182 = vunpack.c.l.b16 %v146
    %v183 = vunpack.c.l.b16 %v147
    %v184 = vpack.c.b16 %v169, %v168
    %v185 = vpack.c.b16 %v171, %v170
    %v186 = vpack.c.b16 %v173, %v172
    %v187 = vpack.c.b16 %v175, %v174
    %v188 = vpack.c.b16 %v177, %v176
    %v189 = vpack.c.b16 %v179, %v178
    %v190 = vpack.c.b16 %v181, %v180
    %v191 = vpack.c.b16 %v183, %v182
    %200 = vmatpush.bf16.msra.mxu0 %v191
    %201 = vmatpush.bf16.msra.mxu0 %v190
    %202 = vmatpush.bf16.msra.mxu0 %v189
    %203 = vmatpush.bf16.msra.mxu0 %v188
    %204 = vmatpush.bf16.msra.mxu0 %v187
    %205 = vmatpush.bf16.msra.mxu0 %v186
    %206 = vmatpush.bf16.msra.mxu0 %v185
    %207 = vmatpush.bf16.msra.mxu0 %v184
    %208 = vmatmul.bf16.gmra.mxu0 %v131
    %v209 = vpop.f32.mrf.mxu0
    %v210 = vadd.f32 %v150, %v209
    %v211 = vpop.f32.mrf.mxu0
    %212 = vdwg.mxu0
    %v213 = vtanh.pop %v210
    %v214 = vpack.c.bf16 %v213, %v213
    %v215 = vld [vmem:[#allocation8] sm:$0xf]
    %v216 = vld [vmem:[#allocation8 + $0x4] sm:$0xf]
    %v217 = vld [vmem:[#allocation8 + $0x8] sm:$0xf]
    %v218 = vld [vmem:[#allocation8 + $0xc] sm:$0xf]
    %v219 = vld [vmem:[#allocation8 + $0x10] sm:$0xf]
    %v220 = vld [vmem:[#allocation8 + $0x14] sm:$0xf]
    %v221 = vld [vmem:[#allocation8 + $0x18] sm:$0xf]
    %v222 = vld [vmem:[#allocation8 + $0x1c] sm:$0xf]
    %v223 = vld [vmem:[#allocation8 + $0x20] sm:$0xf]
    %v224 = vld [vmem:[#allocation8 + $0x24] sm:$0xf]
    %v225 = vld [vmem:[#allocation8 + $0x28] sm:$0xf]
    %v226 = vld [vmem:[#allocation8 + $0x2c] sm:$0xf]
    %v227 = vld [vmem:[#allocation8 + $0x30] sm:$0xf]
    %v228 = vld [vmem:[#allocation8 + $0x34] sm:$0xf]
    %v229 = vld [vmem:[#allocation8 + $0x38] sm:$0xf]
    %v230 = vld [vmem:[#allocation8 + $0x3c] sm:$0xf]
    %v231 = vld [vmem:[%s6] sm:$0x1]
    %v233 = vperm.slane %v231, 0
    %v251 = vunpack.c.l.b16 %v215
    %v252 = vunpack.c.l.b16 %v216
    %v253 = vunpack.c.l.b16 %v217
    %v254 = vunpack.c.l.b16 %v218
    %v255 = vunpack.c.l.b16 %v219
    %v256 = vunpack.c.l.b16 %v220
    %v257 = vunpack.c.l.b16 %v221
    %v258 = vunpack.c.l.b16 %v222
    %v259 = vunpack.c.l.b16 %v223
    %v260 = vunpack.c.l.b16 %v224
    %v261 = vunpack.c.l.b16 %v225
    %v262 = vunpack.c.l.b16 %v226
    %v263 = vunpack.c.l.b16 %v227
    %v264 = vunpack.c.l.b16 %v228
    %v265 = vunpack.c.l.b16 %v229
    %v266 = vunpack.c.l.b16 %v230
    %v267 = vpack.c.b16 %v252, %v251
    %v268 = vpack.c.b16 %v254, %v253
    %v269 = vpack.c.b16 %v256, %v255
    %v270 = vpack.c.b16 %v258, %v257
    %v271 = vpack.c.b16 %v260, %v259
    %v272 = vpack.c.b16 %v262, %v261
    %v273 = vpack.c.b16 %v264, %v263
    %v274 = vpack.c.b16 %v266, %v265
    %283 = vmatpush.bf16.msra.mxu0 %v274
    %284 = vmatpush.bf16.msra.mxu0 %v273
    %285 = vmatpush.bf16.msra.mxu0 %v272
    %286 = vmatpush.bf16.msra.mxu0 %v271
    %287 = vmatpush.bf16.msra.mxu0 %v270
    %288 = vmatpush.bf16.msra.mxu0 %v269
    %289 = vmatpush.bf16.msra.mxu0 %v268
    %290 = vmatpush.bf16.msra.mxu0 %v267
    %291 = vmatmul.bf16.gmra.mxu0 %v214
    %v292 = vpop.f32.mrf.mxu0
    %v293 = vadd.f32 %v233, %v292
    %v294 = vpop.f32.mrf.mxu0
    %295 = vdwg.mxu0
    %v296 = vpack.c.bf16 %v293, %v293
    %297 = vst [vmem:[#allocation10] sm:$0xf] %v296
    %v298 = vunpack.c.l.bf16 %v296
    %v299 = vlaneseq
    %v300 = vand.u32 %v299, 127
    %vm301 = vcmp.lt.s32.totalorder %v300, 16
    %v302 = vsel %vm301, %v298, -inf
    %303 = vmax.xlane.f32.xlu0 %v302
    %v304 = vpop.xlane.xlu0 %303
    %vm305 = vcmp.eq.f32.partialorder %v302, %v304
    %vm306 = vmand %vm301, %vm305
    %v307 = vsel %vm306, %v300, 128
    %v308 = vand.u32 %v307, 65535
    %v309 = vshra.s32 %v307, 16
    %v310 = vcvt.s32.f32 %v308
    %v311 = vcvt.s32.f32 %v309
    %312 = vmin.xlane.f32.xlu0 %v311
    %v313 = vpop.xlane.xlu0 %312
    %vm314 = vcmp.eq.f32.partialorder %v311, %v313
    %v315 = vsel %vm314, %v310, inf
    %316 = vmin.xlane.f32.xlu0 %v315
    %v317 = vpop.xlane.xlu0 %316
    %v318 = vcvt.f32.s32 %v317
    %v319 = vcvt.f32.s32 %v313
    %v320 = vshll.u32 %v319, 16
    %v321 = vadd.s32 %v320, %v318
    %vm322 = vcmask 7168
    %323 = vst.msk [vmem:[%s7] sm:$0xff] %vm322, %v321
    // Predicated region
    $region46: #{tpu_custom_call.1} parent=1 // pred_check
      _
    $region47: #{tpu_custom_call.1} parent=1 // pred_check_branch
      %325 = sbr.rel (0) target = $region49
    $region48: #{tpu_custom_call.1} parent=1 // pred_region
      _
    $region49: #{tpu_custom_call.1} parent=1 // pred_fallthru
      _
    // Predicated region
    $region50: #{tpu_custom_call.1} parent=1 // pred_check
      _
    $region51: #{tpu_custom_call.1} parent=1 // pred_check_branch
      %327 = sbr.rel (0) target = $region53
    $region52: #{tpu_custom_call.1} parent=1 // pred_region
      %329 = vsyncadd [#allocation4], 0
      %s331 = sshll.u32 [#allocation10], 4
      %s332 = int_to_ptr.vmem [resolvable:$true] %s331
      %s333 = sshll.u32 %s8, 4
      %s334 = int_to_ptr.hbm [resolvable:$true] %s333
      %336 = dma.vmem_to_hbm [thread:$0]  %s332, 64, %s334, [#allocation4]
    $region53: #{tpu_custom_call.1} parent=1 // pred_fallthru
      _
    // Predicated region
    $region54: #{tpu_custom_call.1} parent=1 // pred_check
      _
    $region55: #{tpu_custom_call.1} parent=1 // pred_check_branch
      %338 = sbr.rel (0) target = $region57
    $region56: #{tpu_custom_call.1} parent=1 // pred_region
      _
    $region57: #{tpu_custom_call.1} parent=1 // pred_fallthru
      _
    // Predicated region
    $region58: #{tpu_custom_call.1} parent=1 // pred_check
      _
    $region59: #{tpu_custom_call.1} parent=1 // pred_check_branch
      %340 = sbr.rel (0) target = $region61
    $region60: #{tpu_custom_call.1} parent=1 // pred_region
      %342 = dma.done [#allocation4], 64
    $region61: #{tpu_custom_call.1} parent=1 // pred_fallthru
      _
    %343 = vsyncpa [#allocation3], 1
    %344 = vsyncpa [#allocation6], 1
    %345 = vsyncpa [#allocation9], 1
    %346 = vsyncpa [#allocation4], 1

</llo_original>
